<compile_context>
chip_gen: v6e
topology: v6e:2x2x1
jax: 0.10.0
libtpu: 0.0.40
codegen_flags: <defaults>
</compile_context>

<pallas_src>
import functools

import jax
import jax.numpy as jnp
from jax.experimental import pallas as pl
from jax.experimental.pallas import tpu as pltpu

_LANE = 128
_SUBLANE = 8


def _residual_linear_kernel(x_ref, w_ref, b_ref, o_ref, *, tn, n_col_tiles):
    # x_ref: (TM, Hp) bf16  full contraction dim; block is resident across j
    # w_ref: (Hp, TN) bf16  pre-transposed weight column slab
    # b_ref: (1,  TN) f32
    # o_ref: (TM, TN) x.dtype
    x = x_ref[...]                                            # (TM, Hp) bf16
    y = jnp.dot(x, w_ref[...],
                preferred_element_type=jnp.float32)           # MXU, f32 acc
    y = y + b_ref[...]                                        # bias in f32 (VPU)

    if n_col_tiles == 1:
        x_res = x                                             # TN == Hp
    else:
        j = pl.program_id(1)
        col = pl.multiple_of(j * tn, _LANE)                   # lane-aligned
        x_res = x_ref[:, pl.ds(col, tn)]                      # (TM, TN) bf16

    o_ref[...] = (y + x_res.astype(jnp.float32)).astype(o_ref.dtype)


def prepare_params(w, b):
    """One-time parameter prep (outside the hot path).

    w: (H_out, H_in) f32  -- PyTorch nn.Linear weight
    b: (H_out,)      f32
    Returns (wt_bf16, b_row): wt_bf16 = w.T in bf16, b_row = (1, H) f32.
    """
    wt_bf16 = jnp.asarray(w).T.astype(jnp.bfloat16)
    b_row = jnp.asarray(b).astype(jnp.float32).reshape(1, -1)
    return wt_bf16, b_row


def _vmem_capacity_bytes():
    try:
        return int(pltpu.get_tpu_info().vmem_capacity_bytes)
    except Exception:
        return 64 << 20                     # conservative: v7x per-TC VMEM


def _pick_tn(hp, budget):
    """Prefer a fully resident weight (tn == hp); else the largest
    lane-multiple *divisor* of hp whose double-buffered column slab fits
    about half the budget (handles hp like 768/640 cleanly)."""
    if 2 * hp * hp * 2 <= budget // 2:
        return hp
    n_lanes = hp // _LANE
    for d in range(n_lanes, 0, -1):
        if n_lanes % d == 0 and 2 * hp * (d * _LANE) * 2 <= budget // 2:
            return d * _LANE
    return _LANE


def _pick_tm(M, hp, tn, out_bytes, budget):
    """Row tile: fill the VMEM budget, use bigger tiles when the weight must
    be re-streamed per row tile, keep >= 2 row tiles for v7x's 2 TCs."""
    w_bytes = 2 * hp * tn * 2               # budget the weight double-buffered
    b_bytes = 2 * tn * 4
    avail = max(budget - w_bytes - b_bytes - (2 << 20), 0)
    per_row = 2 * (hp * 2 + tn * out_bytes)  # db bf16 x-block + db out-block
    tm_cap = max(_SUBLANE, (avail // per_row) // _SUBLANE * _SUBLANE)
    tm_target = 256 if tn == hp else 512     # big tm amortizes weight slabs
    tm = min(tm_target, tm_cap)
    if M > _SUBLANE:                         # keep >= 2 row tiles (megacore)
        half = -(-((M + 1) // 2) // _SUBLANE) * _SUBLANE
        tm = min(tm, half)
    return max(_SUBLANE, tm)


def residual_apply(x, wt_bf16, b_row, *, tm=None, tn=None):
    """Computes fn(x) + x with fn(x) = x @ wt + b, fused in one Pallas kernel.

    x:        (B, S, H)  activations
    wt_bf16:  (H, H)     pre-transposed bf16 weight (from prepare_params)
    b_row:    (1, H)     f32 bias row (from prepare_params)
    """
    B, S, H = x.shape
    M = B * S
    out_dtype = x.dtype
    out_bytes = jnp.dtype(out_dtype).itemsize

    hp = pl.cdiv(H, _LANE) * _LANE           # lane-dense contraction dim

    # bf16 activations end-to-end on the input side.
    x2d = x.reshape(M, H).astype(jnp.bfloat16)
    if hp != H:
        # Contraction padding must be genuine zeros. Rows need no padding:
        # the row grid is ragged and OOB rows are masked on store.
        x2d = jnp.pad(x2d, ((0, 0), (0, hp - H)))
    w2d = wt_bf16
    if w2d.shape != (hp, hp):
        w2d = jnp.pad(w2d, ((0, hp - w2d.shape[0]), (0, hp - w2d.shape[1])))
    b2d = b_row
    if b2d.shape != (1, hp):
        b2d = jnp.pad(b2d, ((0, 0), (0, hp - b2d.shape[1])))

    cap = _vmem_capacity_bytes()
    budget = max(cap - (16 << 20), 16 << 20)  # leave internal-scratch headroom

    if tn is None:
        tn = _pick_tn(hp, budget)
    assert tn % _LANE == 0 and hp % tn == 0, (tn, hp)
    if tm is None:
        tm = _pick_tm(M, hp, tn, out_bytes, budget)
    assert tm % _SUBLANE == 0, tm

    n_row_tiles = pl.cdiv(M, tm)              # ragged last tile is fine
    n_col_tiles = hp // tn

    kernel = functools.partial(_residual_linear_kernel, tn=tn,
                               n_col_tiles=n_col_tiles)

    tile_bytes = (2 * hp * tn * 2 +           # weight slab (double-buffered)
                  2 * tm * hp * 2 +           # bf16 x block
                  2 * tn * 4 +                # bias
                  2 * tm * tn * out_bytes)    # output block
    vmem_limit = int(min(max(tile_bytes + (4 << 20), 32 << 20),
                         cap - (4 << 20)))    # never above physical VMEM (v7x)

    # Weight is streamed once if resident (index (0,0) everywhere), otherwise
    # re-streamed once per row tile.
    w_stream = hp * hp * 2 * (1 if n_col_tiles == 1 else n_row_tiles)
    cost = pl.CostEstimate(
        flops=2 * M * hp * hp,
        transcendentals=0,
        bytes_accessed=M * hp * 2 + w_stream + hp * 4 + M * hp * out_bytes,
    )

    out2d = pl.pallas_call(
        kernel,
        out_shape=jax.ShapeDtypeStruct((M, hp), out_dtype),
        grid_spec=pltpu.PrefetchScalarGridSpec(
            num_scalar_prefetch=0,
            grid=(n_row_tiles, n_col_tiles),
            in_specs=[
                pl.BlockSpec((tm, hp), lambda i, j: (i, 0)),  # x rows (resident over j)
                pl.BlockSpec((hp, tn), lambda i, j: (0, j)),  # weight column slab
                pl.BlockSpec((1, tn), lambda i, j: (0, j)),   # bias slab
            ],
            out_specs=pl.BlockSpec((tm, tn), lambda i, j: (i, j)),
        ),
        compiler_params=pltpu.CompilerParams(
            dimension_semantics=("parallel", "parallel"),
            vmem_limit_bytes=vmem_limit,
        ),
        cost_estimate=cost,
    )(x2d, w2d, b2d)

    if hp != H:
        out2d = out2d[:, :H]
    return out2d.reshape(B, S, H)


if __name__ == "__main__":
    key = jax.random.PRNGKey(0)
    kx, kw, kb = jax.random.split(key, 3)

    # Small lane-dense demo: M = 256 rows -> 2 row tiles (both v7x TCs busy),
    # hidden = 256 -> resident weight, tn = 256 (fills a 256-wide MXU column).
    batch, seq, hidden = 2, 128, 256
    x = jax.random.normal(kx, (batch, seq, hidden), dtype=jnp.float32)
    # Deterministic synthetic nn.Linear(hidden, hidden) parameters (out, in).
    w = jax.random.normal(kw, (hidden, hidden), dtype=jnp.float32) * 0.05
    b = jax.random.normal(kb, (hidden,), dtype=jnp.float32) * 0.05

    wt_bf16, b_row = prepare_params(w, b)     # one-time prep, not per call
    out = residual_apply(x, wt_bf16, b_row)
    out = jax.block_until_ready(out)
    assert out.shape == x.shape and out.dtype == x.dtype

    # Reference matching the kernel's bf16-input / f32-accumulate math
    # (residual added at bf16 precision of x, like the kernel).
    x_bf = x.astype(jnp.bfloat16).reshape(-1, hidden)
    ref_bf16 = (jnp.dot(x_bf, wt_bf16, preferred_element_type=jnp.float32)
                + b_row + x_bf.astype(jnp.float32)).reshape(x.shape)
    assert jnp.allclose(out, ref_bf16, atol=2e-3, rtol=2e-2), \
        "mismatch vs bf16 reference"

    # Looser check against the exact f32 math of the PyTorch module.
    ref_f32 = jnp.einsum("bsh,oh->bso", x, w) + b + x
    assert jnp.allclose(out, ref_f32, atol=6e-2, rtol=6e-2), \
        "mismatch vs f32 reference"

    print("KERNEL_OK")
</pallas_src>

<mosaic_0001>
module attributes {stable_mosaic.version = 11 : i64} {
  func.func @_residual_linear_kernel(%arg0: i32, %arg1: i32, %arg2: memref<128x256xbf16, #tpu.memory_space<vmem>>, %arg3: memref<256x256xbf16, #tpu.memory_space<vmem>>, %arg4: memref<1x256xf32, #tpu.memory_space<vmem>>, %arg5: memref<128x256xf32, #tpu.memory_space<vmem>>) attributes {dimension_semantics = [#tpu.dimension_semantics<parallel>, #tpu.dimension_semantics<parallel>], iteration_bounds = array<i64: 2, 1>, scalar_prefetch = 0 : i64, scratch_operands = 0 : i64, tpu.core_type = #tpu.core_type<tc>, window_params = [{transform_indices = @transform_0, window_bounds = array<i64: 128, 256>}, {transform_indices = @transform_1, window_bounds = array<i64: 256, 256>}, {transform_indices = @transform_2, window_bounds = array<i64: 1, 256>}, {transform_indices = @transform_3, window_bounds = array<i64: 128, 256>}]} {
    %c0 = arith.constant 0 : index
    %c0_0 = arith.constant 0 : index
    %0 = vector.load %arg2[%c0, %c0_0] : memref<128x256xbf16, #tpu.memory_space<vmem>>, vector<128x256xbf16>
    %c0_1 = arith.constant 0 : index
    %c0_2 = arith.constant 0 : index
    %1 = vector.load %arg3[%c0_1, %c0_2] : memref<256x256xbf16, #tpu.memory_space<vmem>>, vector<256x256xbf16>
    %cst = arith.constant dense<0.000000e+00> : vector<128x256xf32>
    %2 = tpu.matmul %0, %1, %cst {dimension_numbers = #tpu.dot_dimension_numbers<[1], [0], [0], [1], [0, 0, 1, 1], [], []>} : vector<128x256xbf16>, vector<256x256xbf16>, vector<128x256xf32> -> vector<128x256xf32>
    %c0_3 = arith.constant 0 : index
    %c0_4 = arith.constant 0 : index
    %3 = vector.load %arg4[%c0_3, %c0_4] : memref<1x256xf32, #tpu.memory_space<vmem>>, vector<1x256xf32>
    %4 = vector.broadcast %3 : vector<1x256xf32> to vector<128x256xf32>
    %5 = arith.addf %2, %4 : vector<128x256xf32>
    %6 = arith.extf %0 : vector<128x256xbf16> to vector<128x256xf32>
    %7 = arith.addf %5, %6 : vector<128x256xf32>
    %c0_5 = arith.constant 0 : index
    %c0_6 = arith.constant 0 : index
    %8 = vector.load %arg5[%c0_5, %c0_6] : memref<128x256xf32, #tpu.memory_space<vmem>>, vector<128x256xf32>
    tpu.vector_store %arg5[%c0_5, %c0_6], %7 {strides = array<i32>} : memref<128x256xf32, #tpu.memory_space<vmem>>, vector<128x256xf32>,
    return
  }
  func.func @transform_0(%arg0: i32, %arg1: i32) -> (i32, i32) {
    %c0_i32 = arith.constant 0 : i32
    %c0_i32_0 = arith.constant 0 : i32
    return %arg0, %c0_i32 : i32, i32
  }
  func.func @transform_1(%arg0: i32, %arg1: i32) -> (i32, i32) {
    %c0_i32 = arith.constant 0 : i32
    %c0_i32_0 = arith.constant 0 : i32
    return %c0_i32, %arg1 : i32, i32
  }
  func.func @transform_2(%arg0: i32, %arg1: i32) -> (i32, i32) {
    %c0_i32 = arith.constant 0 : i32
    %c0_i32_0 = arith.constant 0 : i32
    return %c0_i32, %arg1 : i32, i32
  }
  func.func @transform_3(%arg0: i32, %arg1: i32) -> (i32, i32) {
    %c0_i32 = arith.constant 0 : i32
    return %arg0, %arg1 : i32, i32
  }
}

</mosaic_0001>

<llo_original>
// kernel: tpu_custom_call.1
$region0: #{tpu_custom_call.1}
  #allocation0 [shape = 'u32[]', space=smem, size = 0x4, offset = 0x4, fixed_abs, tag = 'smem constant byte address 0x4 - core index']
  #allocation1 [shape = 'u32[144,128]{1,0:T(1,128)}', space=vmem, size = 0x12000, scoped, tag = 'internal scratch']
  %s0 = inlined_call_operand.hbm [shape: bf16[256,256], index: 0, kind: input, shape index: {}]
  %s1 = inlined_call_operand.hbm [shape: bf16[256,256], index: 1, kind: input, shape index: {}]
  %s2 = inlined_call_operand.vmem [shape: f32[1,256], index: 2, kind: input, shape index: {}]
  %s3 = inlined_call_operand.hbm [shape: f32[256,256], index: 3, kind: output, shape index: {}]
  %s4 = sld [smem:[#allocation0]]
  $region53: #{tpu_custom_call.1} parent=0
    _
  %s6 = ssub.s32 1, %s4
  %s7 = scalar_select 0, %s6, %s4
  $region1: #{tpu_custom_call.1} parent=0
    #allocation2 [shape = 'u8[131072]{0}', space=vmem, size = 0x20000, scoped, tag = 'input window, operand 0']
    #allocation3 [shape = 's32[2]{0}', space=sflag, size = 0x8, scoped, tag = 'scoped memory for tpu_custom_call.1']
    #allocation4 [shape = 's32[2]{0}', space=sflag, size = 0x8, scoped, tag = 'scoped memory for tpu_custom_call.1']
    #allocation5 [shape = 'u8[131072]{0}', space=vmem, size = 0x20000, scoped, tag = 'input window, operand 1, single buffered']
    #allocation6 [shape = 's32[1]{0}', space=sflag, size = 0x4, scoped, tag = 'scoped memory for tpu_custom_call.1']
    #allocation7 [shape = 'u8[262144]{0}', space=vmem, size = 0x40000, scoped, tag = 'output window, operand 0']
    %8 = vsyncpa [#allocation3], 0
    %s9 = scalar_lea.sflag [#allocation3], 1
    %10 = vsyncpa %s9, 0
    %11 = vsyncpa [#allocation6], 0
    %12 = vsyncpa [#allocation4], 0
    %s13 = scalar_lea.sflag [#allocation4], 1
    %14 = vsyncpa %s13, 0
    loop: start=0, step=1, limit=4
    $region2: #{tpu_custom_call.1} parent=1 // loop_pre_header
      _
    $region3: #{tpu_custom_call.1} parent=1 // loop_header
      %s16 = sphi 0, %s20
      %p17 = scmp.ge.s32.totalorder %s16, 4
      %s23 = sphi 0, %s35
      %s24 = sphi 0, %s31
      %s25 = sphi 0, %s23
      %s26 = sphi 0, %s24
      %s27 = sphi 0, %s25
      %s28 = sphi 0, %s26
      %s38 = sphi 0, %s40
      %s41 = sphi 0, %s38
      %s42 = sphi 0, %s41
      %s58 = sphi 0, %s42
      %s64 = sphi 0, %s66
      %s67 = sphi 0, %s64
      %s68 = sphi 0, %s67
      %s84 = sphi 0, %s68
      %s90 = sphi 0, %s92
      %s93 = sphi 0, %s90
      %s94 = sphi 0, %s93
      %s110 = sphi 0, %s94
      %s118 = sphi 0, %s120
      %s121 = sphi 0, %s118
      %s122 = sphi 0, %s121
      %s138 = sphi 0, %s122
    $region4: #{tpu_custom_call.1} parent=1 // loop_header_branch
      %19 = sbr.rel (%p17) target = $region8
    $region5: #{tpu_custom_call.1} parent=1 // loop_body
      %s21 = ssub.s32 %s16, 1
      %s22 = ssub.s32 %s16, 2
      %s29 = sadd.s32 1, %s24
      %p30 = scmp.ge.s32.totalorder %s29, 1
      %s31 = scalar_select %p30, 0, %s29
      %s32 = sadd.s32 1, %s23
      %s33 = scalar_select %p30, %s32, %s23
      %p34 = scmp.ge.s32.totalorder %s33, 2
      %s35 = scalar_select %p34, 0, %s33
      %s36 = ssub.s32 %s23, %s35
      %p37 = scmp.eq.s32.totalorder %s36, 0
      %s39 = sadd.s32 %s38, 1
      %s40 = scalar_select %p37, %s38, %s39
      %p43 = pneg %p37
      %p44 = scmp.eq.s32.totalorder %s16, 1
      %p45 = por %p43, %p44
      %p46 = scmp.ne.s32.totalorder %s38, %s41
      %p47 = scmp.eq.s32.totalorder %s16, 0
      %p48 = por %p46, %p47
      %p49 = scmp.ne.s32.totalorder %s38, %s41
      %p50 = scmp.eq.s32.totalorder %s21, 1
      %p51 = por %p49, %p50
      %p52 = scmp.ne.s32.totalorder %s41, %s42
      %p53 = scmp.eq.s32.totalorder %s21, 0
      %p54 = por %p52, %p53
      %p55 = scmp.ne.s32.totalorder %s41, %s42
      %p56 = scmp.eq.s32.totalorder %s22, 1
      %p57 = por %p55, %p56
      %p59 = scmp.ne.s32.totalorder %s42, %s58
      %p60 = scmp.eq.s32.totalorder %s22, 0
      %p61 = por %p59, %p60
      %s62 = ssub.s32 %s24, %s31
      %p63 = scmp.eq.s32.totalorder %s62, 0
      %s65 = sadd.s32 %s64, 1
      %s66 = scalar_select %p63, %s64, %s65
      %p69 = pneg %p63
      %p70 = scmp.eq.s32.totalorder %s16, 1
      %p71 = por %p69, %p70
      %p72 = scmp.ne.s32.totalorder %s64, %s67
      %p73 = scmp.eq.s32.totalorder %s16, 0
      %p74 = por %p72, %p73
      %p75 = scmp.ne.s32.totalorder %s64, %s67
      %p76 = scmp.eq.s32.totalorder %s21, 1
      %p77 = por %p75, %p76
      %p78 = scmp.ne.s32.totalorder %s67, %s68
      %p79 = scmp.eq.s32.totalorder %s21, 0
      %p80 = por %p78, %p79
      %p81 = scmp.ne.s32.totalorder %s67, %s68
      %p82 = scmp.eq.s32.totalorder %s22, 1
      %p83 = por %p81, %p82
      %p85 = scmp.ne.s32.totalorder %s68, %s84
      %p86 = scmp.eq.s32.totalorder %s22, 0
      %p87 = por %p85, %p86
      %s88 = ssub.s32 %s24, %s31
      %p89 = scmp.eq.s32.totalorder %s88, 0
      %s91 = sadd.s32 %s90, 1
      %s92 = scalar_select %p89, %s90, %s91
      %p95 = pneg %p89
      %p96 = scmp.eq.s32.totalorder %s16, 1
      %p97 = por %p95, %p96
      %p98 = scmp.ne.s32.totalorder %s90, %s93
      %p99 = scmp.eq.s32.totalorder %s16, 0
      %p100 = por %p98, %p99
      %p101 = scmp.ne.s32.totalorder %s90, %s93
      %p102 = scmp.eq.s32.totalorder %s21, 1
      %p103 = por %p101, %p102
      %p104 = scmp.ne.s32.totalorder %s93, %s94
      %p105 = scmp.eq.s32.totalorder %s21, 0
      %p106 = por %p104, %p105
      %p107 = scmp.ne.s32.totalorder %s93, %s94
      %p108 = scmp.eq.s32.totalorder %s22, 1
      %p109 = por %p107, %p108
      %p111 = scmp.ne.s32.totalorder %s94, %s110
      %p112 = scmp.eq.s32.totalorder %s22, 0
      %p113 = por %p111, %p112
      %s114 = ssub.s32 %s23, %s35
      %s115 = ssub.s32 %s24, %s31
      %s116 = sor.u32 %s114, %s115
      %p117 = scmp.eq.s32.totalorder %s116, 0
      %s119 = sadd.s32 %s118, 1
      %s120 = scalar_select %p117, %s118, %s119
      %p123 = pneg %p117
      %p124 = scmp.eq.s32.totalorder %s16, 1
      %p125 = por %p123, %p124
      %p126 = scmp.ne.s32.totalorder %s118, %s121
      %p127 = scmp.eq.s32.totalorder %s16, 0
      %p128 = por %p126, %p127
      %p129 = scmp.ne.s32.totalorder %s118, %s121
      %p130 = scmp.eq.s32.totalorder %s21, 1
      %p131 = por %p129, %p130
      %p132 = scmp.ne.s32.totalorder %s121, %s122
      %p133 = scmp.eq.s32.totalorder %s21, 0
      %p134 = por %p132, %p133
      %p135 = scmp.ne.s32.totalorder %s121, %s122
      %p136 = scmp.eq.s32.totalorder %s22, 1
      %p137 = por %p135, %p136
      %p139 = scmp.ne.s32.totalorder %s122, %s138
      %p140 = scmp.eq.s32.totalorder %s22, 0
      %p141 = por %p139, %p140
      %p142 = scmp.le.s32.totalorder 1, %s16
      %p143 = scmp.lt.s32.totalorder %s16, 3
      %p144 = pnand %p142, %p143
      %p145 = pneg %p144
      // Predicated region
      $region9: #{tpu_custom_call.1} parent=5 // pred_check
        _
      $region10: #{tpu_custom_call.1} parent=5 // pred_check_branch
        %147 = sbr.rel (%p144) target = $region12
      $region11: #{tpu_custom_call.1} parent=5 // pred_region
        %s148 = ssub.s32 %s16, 1
        // Predicated region
        $region13: #{tpu_custom_call.1} parent=11 // pred_check
          %p149 = pneg %p80
        $region14: #{tpu_custom_call.1} parent=11 // pred_check_branch
          %151 = sbr.rel (%p149) target = $region16
        $region15: #{tpu_custom_call.1} parent=11 // pred_region
          %s152 = smul.u32 2, %s26
          %s154 = ssub.s32 4096, 4096
          %155 = vsyncadd [#allocation6], %s154
          %s156 = smul.addr %s152, 64
          %s157 = scalar_lea.hbm %s1, %s156
          %s158 = sshll.u32 [#allocation5], 4
          %s159 = int_to_ptr.vmem [resolvable:$true] %s158
          %164 = dma.hbm_to_vmem [thread:$0]  %s157, 4096, %s159, [#allocation6], 128, 128, 8
        $region16: #{tpu_custom_call.1} parent=11 // pred_fallthru
          _
        // Predicated region
        $region17: #{tpu_custom_call.1} parent=11 // pred_check
          %p165 = pneg %p106
        $region18: #{tpu_custom_call.1} parent=11 // pred_check_branch
          %167 = sbr.rel (%p165) target = $region20
        $region19: #{tpu_custom_call.1} parent=11 // pred_region
          %s168 = smul.u32 2, %s26
          %p169 = scmp.lt.s32.totalorder %s168, 1
          %s170 = scalar_select %p169, %s168, 1
          %s171 = scalar_lea.vmem %s2, %s170
          %s172 = smul.u32 2, %s26
        $region20: #{tpu_custom_call.1} parent=11 // pred_fallthru
          _
      $region12: #{tpu_custom_call.1} parent=5 // pred_fallthru
        _
      %p173 = scmp.lt.s32.totalorder %s16, 2
      // Predicated region
      $region21: #{tpu_custom_call.1} parent=5 // pred_check
        %p174 = pneg %p173
      $region22: #{tpu_custom_call.1} parent=5 // pred_check_branch
        %176 = sbr.rel (%p174) target = $region24
      $region23: #{tpu_custom_call.1} parent=5 // pred_region
        // Predicated region
        $region25: #{tpu_custom_call.1} parent=23 // pred_check
          %p177 = pneg %p48
        $region26: #{tpu_custom_call.1} parent=23 // pred_check_branch
          %179 = sbr.rel (%p177) target = $region28
        $region27: #{tpu_custom_call.1} parent=23 // pred_region
          %s180 = sand.u32 %s38, 1
          %s181 = scalar_lea.sflag [#allocation3], %s180
          %s182 = sand.u32 %s38, 1
          %s183 = smul.addr %s182, 128
          %s184 = scalar_lea.vmem [#allocation2], %s183
          %s185 = smul.u32 16, %s23
          %s187 = ssub.s32 2048, 2048
          %188 = vsyncadd %s181, %s187
          %s189 = smul.addr %s185, 2
          %s190 = smul.addr %s189, 64
          %s191 = scalar_lea.hbm %s0, %s190
          %s192 = sshll.u32 %s184, 4
          %s193 = int_to_ptr.vmem [resolvable:$true] %s192
          %198 = dma.hbm_to_vmem [thread:$0]  %s191, 2048, %s193, %s181, 128, 128, 8
        $region28: #{tpu_custom_call.1} parent=23 // pred_fallthru
          _
      $region24: #{tpu_custom_call.1} parent=5 // pred_fallthru
        _
      %p199 = scmp.le.s32.totalorder 1, %s16
      %p200 = scmp.lt.s32.totalorder %s16, 3
      %p201 = pnand %p199, %p200
      %p202 = pneg %p201
      // Predicated region
      $region29: #{tpu_custom_call.1} parent=5 // pred_check
        _
      $region30: #{tpu_custom_call.1} parent=5 // pred_check_branch
        %204 = sbr.rel (%p201) target = $region32
      $region31: #{tpu_custom_call.1} parent=5 // pred_region
        %s205 = ssub.s32 %s16, 1
        %s206 = sand.u32 %s41, 1
        %s207 = scalar_lea.sflag [#allocation3], %s206
        %s208 = sand.u32 %s41, 1
        %s209 = smul.addr %s208, 128
        %s210 = scalar_lea.vmem [#allocation2], %s209
        // Predicated region
        $region33: #{tpu_custom_call.1} parent=31 // pred_check
          %p211 = pneg %p54
        $region34: #{tpu_custom_call.1} parent=31 // pred_check_branch
          %213 = sbr.rel (%p211) target = $region36
        $region35: #{tpu_custom_call.1} parent=31 // pred_region
          %214 = dma.done %s207, 2048
        $region36: #{tpu_custom_call.1} parent=31 // pred_fallthru
          _
        // Predicated region
        $region37: #{tpu_custom_call.1} parent=31 // pred_check
          %p215 = pneg %p80
        $region38: #{tpu_custom_call.1} parent=31 // pred_check_branch
          %217 = sbr.rel (%p215) target = $region40
        $region39: #{tpu_custom_call.1} parent=31 // pred_region
          %218 = dma.done [#allocation6], 4096
        $region40: #{tpu_custom_call.1} parent=31 // pred_fallthru
          _
        %s219 = sand.u32 %s41, 1
        %s220 = scalar_lea.sflag [#allocation3], %s219
        %s221 = sand.u32 %s41, 1
        %s222 = smul.addr %s221, 128
        %s223 = scalar_lea.vmem [#allocation2], %s222
        %p224 = pneg %p54
        %p225 = pneg %p51
        %p226 = pneg %p80
        %p227 = pneg %p77
        %s228 = smul.u32 2, %s26
        %p229 = scmp.lt.s32.totalorder %s228, 1
        %s230 = scalar_select %p229, %s228, 1
        %s231 = scalar_lea.vmem %s2, %s230
        %p232 = pneg %p106
        %p233 = pneg %p103
        %p234 = pneg %p134
        %p235 = pneg %p131
        %s236 = sand.u32 %s121, 1
        %s237 = scalar_lea.sflag [#allocation4], %s236
        %s238 = sand.u32 %s121, 1
        %s239 = smul.addr %s238, 256
        %s240 = scalar_lea.vmem [#allocation7], %s239
        %s241 = smul.u32 16, %s25
        %s242 = smul.u32 2, %s26
        %s243 = smul.u32 2, %s26
        %p244 = scmp.lt.s32.totalorder %s243, 1
        %s245 = scalar_select %p244, %s243, 1
        %s246 = scalar_lea.vmem %s2, %s245
        %s247 = smul.u32 2, %s26
        %s248 = smul.u32 16, %s25
        %s249 = smul.u32 2, %s26
        %v250 = vld [vmem:[%s210] sm:$0xff]
        %v251 = vld [vmem:[%s210 + $0x8] sm:$0xff]
        %v252 = vld [vmem:[%s210 + $0x10] sm:$0xff]
        %v253 = vld [vmem:[%s210 + $0x18] sm:$0xff]
        %v254 = vld [vmem:[%s210 + $0x20] sm:$0xff]
        %v255 = vld [vmem:[%s210 + $0x28] sm:$0xff]
        %v256 = vld [vmem:[%s210 + $0x30] sm:$0xff]
        %v257 = vld [vmem:[%s210 + $0x38] sm:$0xff]
        %v258 = vld [vmem:[%s210 + $0x40] sm:$0xff]
        %v259 = vld [vmem:[%s210 + $0x48] sm:$0xff]
        %v260 = vld [vmem:[%s210 + $0x50] sm:$0xff]
        %v261 = vld [vmem:[%s210 + $0x58] sm:$0xff]
        %v262 = vld [vmem:[%s210 + $0x60] sm:$0xff]
        %v263 = vld [vmem:[%s210 + $0x68] sm:$0xff]
        %v264 = vld [vmem:[%s210 + $0x70] sm:$0xff]
        %v265 = vld [vmem:[%s210 + $0x78] sm:$0xff]
        %v266 = vld [vmem:[#allocation5] sm:$0xff]
        %v267 = vld [vmem:[#allocation5 + $0x8] sm:$0xff]
        %v268 = vld [vmem:[#allocation5 + $0x10] sm:$0xff]
        %v269 = vld [vmem:[#allocation5 + $0x18] sm:$0xff]
        %v270 = vld [vmem:[#allocation5 + $0x20] sm:$0xff]
        %v271 = vld [vmem:[#allocation5 + $0x28] sm:$0xff]
        %v272 = vld [vmem:[#allocation5 + $0x30] sm:$0xff]
        %v273 = vld [vmem:[#allocation5 + $0x38] sm:$0xff]
        %v274 = vld [vmem:[#allocation5 + $0x40] sm:$0xff]
        %v275 = vld [vmem:[#allocation5 + $0x48] sm:$0xff]
        %v276 = vld [vmem:[#allocation5 + $0x50] sm:$0xff]
        %v277 = vld [vmem:[#allocation5 + $0x58] sm:$0xff]
        %v278 = vld [vmem:[#allocation5 + $0x60] sm:$0xff]
        %v279 = vld [vmem:[#allocation5 + $0x68] sm:$0xff]
        %v280 = vld [vmem:[#allocation5 + $0x70] sm:$0xff]
        %v281 = vld [vmem:[#allocation5 + $0x78] sm:$0xff]
        %v282 = vld [vmem:[#allocation5 + $0x80] sm:$0xff]
        %v283 = vld [vmem:[#allocation5 + $0x88] sm:$0xff]
        %v284 = vld [vmem:[#allocation5 + $0x90] sm:$0xff]
        %v285 = vld [vmem:[#allocation5 + $0x98] sm:$0xff]
        %v286 = vld [vmem:[#allocation5 + $0xa0] sm:$0xff]
        %v287 = vld [vmem:[#allocation5 + $0xa8] sm:$0xff]
        %v288 = vld [vmem:[#allocation5 + $0xb0] sm:$0xff]
        %v289 = vld [vmem:[#allocation5 + $0xb8] sm:$0xff]
        %v290 = vld [vmem:[#allocation5 + $0xc0] sm:$0xff]
        %v291 = vld [vmem:[#allocation5 + $0xc8] sm:$0xff]
        %v292 = vld [vmem:[#allocation5 + $0xd0] sm:$0xff]
        %v293 = vld [vmem:[#allocation5 + $0xd8] sm:$0xff]
        %v294 = vld [vmem:[#allocation5 + $0xe0] sm:$0xff]
        %v295 = vld [vmem:[#allocation5 + $0xe8] sm:$0xff]
        %v296 = vld [vmem:[#allocation5 + $0xf0] sm:$0xff]
        %v297 = vld [vmem:[#allocation5 + $0xf8] sm:$0xff]
        %v298 = vld [vmem:[%s246] sm:$0x3]
        %v300 = vlaneseq
        %v301 = vshrl.u32 %v300, 7
        %v302 = vsub.s32 0, %v301
        %v303 = vrot.slane %v298, %v302
        %v304 = vlaneseq
        %v305 = vshrl.u32 %v304, 7
        %v306 = vsub.s32 1, %v305
        %v307 = vrot.slane %v298, %v306
        %v326 = vunpack.c.l.b16 %v250
        %v327 = vunpack.c.h.b16 %v250
        %v328 = vunpack.c.l.b16 %v251
        %v329 = vunpack.c.h.b16 %v251
        %v330 = vunpack.c.l.b16 %v252
        %v331 = vunpack.c.h.b16 %v252
        %v332 = vunpack.c.l.b16 %v253
        %v333 = vunpack.c.h.b16 %v253
        %v334 = vunpack.c.l.b16 %v254
        %v335 = vunpack.c.h.b16 %v254
        %v336 = vunpack.c.l.b16 %v255
        %v337 = vunpack.c.h.b16 %v255
        %v338 = vunpack.c.l.b16 %v256
        %v339 = vunpack.c.h.b16 %v256
        %v340 = vunpack.c.l.b16 %v257
        %v341 = vunpack.c.h.b16 %v257
        %v342 = vunpack.c.l.b16 %v258
        %v343 = vunpack.c.h.b16 %v258
        %v344 = vunpack.c.l.b16 %v259
        %v345 = vunpack.c.h.b16 %v259
        %v346 = vunpack.c.l.b16 %v260
        %v347 = vunpack.c.h.b16 %v260
        %v348 = vunpack.c.l.b16 %v261
        %v349 = vunpack.c.h.b16 %v261
        %v350 = vunpack.c.l.b16 %v262
        %v351 = vunpack.c.h.b16 %v262
        %v352 = vunpack.c.l.b16 %v263
        %v353 = vunpack.c.h.b16 %v263
        %v354 = vunpack.c.l.b16 %v264
        %v355 = vunpack.c.h.b16 %v264
        %v356 = vunpack.c.l.b16 %v265
        %v357 = vunpack.c.h.b16 %v265
        %v358 = vpack.c.b16 %v328, %v326
        %v359 = vpack.c.b16 %v329, %v327
        %v360 = vpack.c.b16 %v332, %v330
        %v361 = vpack.c.b16 %v333, %v331
        %v362 = vpack.c.b16 %v336, %v334
        %v363 = vpack.c.b16 %v337, %v335
        %v364 = vpack.c.b16 %v340, %v338
        %v365 = vpack.c.b16 %v341, %v339
        %v366 = vpack.c.b16 %v344, %v342
        %v367 = vpack.c.b16 %v345, %v343
        %v368 = vpack.c.b16 %v348, %v346
        %v369 = vpack.c.b16 %v349, %v347
        %v370 = vpack.c.b16 %v352, %v350
        %v371 = vpack.c.b16 %v353, %v351
        %v372 = vpack.c.b16 %v356, %v354
        %v373 = vpack.c.b16 %v357, %v355
        %v422 = vunpack.c.l.b16 %v266
        %v423 = vunpack.c.h.b16 %v266
        %v424 = vunpack.c.l.b16 %v267
        %v425 = vunpack.c.h.b16 %v267
        %v426 = vunpack.c.l.b16 %v268
        %v427 = vunpack.c.h.b16 %v268
        %v428 = vunpack.c.l.b16 %v269
        %v429 = vunpack.c.h.b16 %v269
        %v430 = vunpack.c.l.b16 %v270
        %v431 = vunpack.c.h.b16 %v270
        %v432 = vunpack.c.l.b16 %v271
        %v433 = vunpack.c.h.b16 %v271
        %v434 = vunpack.c.l.b16 %v272
        %v435 = vunpack.c.h.b16 %v272
        %v436 = vunpack.c.l.b16 %v273
        %v437 = vunpack.c.h.b16 %v273
        %v438 = vunpack.c.l.b16 %v274
        %v439 = vunpack.c.h.b16 %v274
        %v440 = vunpack.c.l.b16 %v275
        %v441 = vunpack.c.h.b16 %v275
        %v442 = vunpack.c.l.b16 %v276
        %v443 = vunpack.c.h.b16 %v276
        %v444 = vunpack.c.l.b16 %v277
        %v445 = vunpack.c.h.b16 %v277
        %v446 = vunpack.c.l.b16 %v278
        %v447 = vunpack.c.h.b16 %v278
        %v448 = vunpack.c.l.b16 %v279
        %v449 = vunpack.c.h.b16 %v279
        %v450 = vunpack.c.l.b16 %v280
        %v451 = vunpack.c.h.b16 %v280
        %v452 = vunpack.c.l.b16 %v281
        %v453 = vunpack.c.h.b16 %v281
        %v454 = vunpack.c.l.b16 %v282
        %v455 = vunpack.c.h.b16 %v282
        %v456 = vunpack.c.l.b16 %v283
        %v457 = vunpack.c.h.b16 %v283
        %v458 = vunpack.c.l.b16 %v284
        %v459 = vunpack.c.h.b16 %v284
        %v460 = vunpack.c.l.b16 %v285
        %v461 = vunpack.c.h.b16 %v285
        %v462 = vunpack.c.l.b16 %v286
        %v463 = vunpack.c.h.b16 %v286
        %v464 = vunpack.c.l.b16 %v287
        %v465 = vunpack.c.h.b16 %v287
        %v466 = vunpack.c.l.b16 %v288
        %v467 = vunpack.c.h.b16 %v288
        %v468 = vunpack.c.l.b16 %v289
        %v469 = vunpack.c.h.b16 %v289
        %v470 = vunpack.c.l.b16 %v290
        %v471 = vunpack.c.h.b16 %v290
        %v472 = vunpack.c.l.b16 %v291
        %v473 = vunpack.c.h.b16 %v291
        %v474 = vunpack.c.l.b16 %v292
        %v475 = vunpack.c.h.b16 %v292
        %v476 = vunpack.c.l.b16 %v293
        %v477 = vunpack.c.h.b16 %v293
        %v478 = vunpack.c.l.b16 %v294
        %v479 = vunpack.c.h.b16 %v294
        %v480 = vunpack.c.l.b16 %v295
        %v481 = vunpack.c.h.b16 %v295
        %v482 = vunpack.c.l.b16 %v296
        %v483 = vunpack.c.h.b16 %v296
        %v484 = vunpack.c.l.b16 %v297
        %v485 = vunpack.c.h.b16 %v297
        %v486 = vpack.c.b16 %v424, %v422
        %v487 = vpack.c.b16 %v425, %v423
        %v488 = vpack.c.b16 %v428, %v426
        %v489 = vpack.c.b16 %v429, %v427
        %v490 = vpack.c.b16 %v432, %v430
        %v491 = vpack.c.b16 %v433, %v431
        %v492 = vpack.c.b16 %v436, %v434
        %v493 = vpack.c.b16 %v437, %v435
        %v494 = vpack.c.b16 %v440, %v438
        %v495 = vpack.c.b16 %v441, %v439
        %v496 = vpack.c.b16 %v444, %v442
        %v497 = vpack.c.b16 %v445, %v443
        %v498 = vpack.c.b16 %v448, %v446
        %v499 = vpack.c.b16 %v449, %v447
        %v500 = vpack.c.b16 %v452, %v450
        %v501 = vpack.c.b16 %v453, %v451
        %v502 = vpack.c.b16 %v456, %v454
        %v503 = vpack.c.b16 %v457, %v455
        %v504 = vpack.c.b16 %v460, %v458
        %v505 = vpack.c.b16 %v461, %v459
        %v506 = vpack.c.b16 %v464, %v462
        %v507 = vpack.c.b16 %v465, %v463
        %v508 = vpack.c.b16 %v468, %v466
        %v509 = vpack.c.b16 %v469, %v467
        %v510 = vpack.c.b16 %v472, %v470
        %v511 = vpack.c.b16 %v473, %v471
        %v512 = vpack.c.b16 %v476, %v474
        %v513 = vpack.c.b16 %v477, %v475
        %v514 = vpack.c.b16 %v480, %v478
        %v515 = vpack.c.b16 %v481, %v479
        %v516 = vpack.c.b16 %v484, %v482
        %v517 = vpack.c.b16 %v485, %v483
        %550 = vmatprep.subr.bf16.mxu0 %v501
        %551 = vmatpush1.bf16.msra.mxu0 %v500
        %552 = vmatprep.subr.bf16.mxu0 %v499
        %553 = vmatpush1.bf16.msra.mxu0 %v498
        %554 = vmatprep.subr.bf16.mxu0 %v497
        %555 = vmatpush1.bf16.msra.mxu0 %v496
        %556 = vmatprep.subr.bf16.mxu0 %v495
        %557 = vmatpush1.bf16.msra.mxu0 %v494
        %558 = vmatprep.subr.bf16.mxu0 %v493
        %559 = vmatpush1.bf16.msra.mxu0 %v492
        %560 = vmatprep.subr.bf16.mxu0 %v491
        %561 = vmatpush1.bf16.msra.mxu0 %v490
        %562 = vmatprep.subr.bf16.mxu0 %v489
        %563 = vmatpush1.bf16.msra.mxu0 %v488
        %564 = vmatprep.subr.bf16.mxu0 %v487
        %565 = vmatpush1.bf16.msra.mxu0 %v486
        %566 = vmatprep.subr.bf16.mxu0 %v517
        %567 = vmatpush2.bf16.msra.mxu0 %v516
        %568 = vmatprep.subr.bf16.mxu0 %v515
        %569 = vmatpush2.bf16.msra.mxu0 %v514
        %570 = vmatprep.subr.bf16.mxu0 %v513
        %571 = vmatpush2.bf16.msra.mxu0 %v512
        %572 = vmatprep.subr.bf16.mxu0 %v511
        %573 = vmatpush2.bf16.msra.mxu0 %v510
        %574 = vmatprep.subr.bf16.mxu0 %v509
        %575 = vmatpush2.bf16.msra.mxu0 %v508
        %576 = vmatprep.subr.bf16.mxu0 %v507
        %577 = vmatpush2.bf16.msra.mxu0 %v506
        %578 = vmatprep.subr.bf16.mxu0 %v505
        %579 = vmatpush2.bf16.msra.mxu0 %v504
        %580 = vmatprep.subr.bf16.mxu0 %v503
        %581 = vmatpush2.bf16.msra.mxu0 %v502
        %582 = vmatprep.mubr.bf16.mxu0 %v359
        %583 = vmatmul.mubr.bf16.gmra.mxu0 %v358
        %v584 = vpop.f32.mrf.mxu0
        %v585 = vadd.f32 %v303, %v584
        %v586 = vpop.f32.mrf.mxu0
        %v587 = vadd.f32 %v307, %v586
        %v588 = vpop.f32.mrf.mxu0
        %v589 = vadd.f32 %v303, %v588
        %v590 = vpop.f32.mrf.mxu0
        %v591 = vadd.f32 %v307, %v590
        %592 = vmatprep.mubr.bf16.mxu0 %v361
        %593 = vmatmul.mubr.bf16.gmra.mxu0 %v360
        %v594 = vpop.f32.mrf.mxu0
        %v595 = vadd.f32 %v303, %v594
        %v596 = vpop.f32.mrf.mxu0
        %v597 = vadd.f32 %v307, %v596
        %v598 = vpop.f32.mrf.mxu0
        %v599 = vadd.f32 %v303, %v598
        %v600 = vpop.f32.mrf.mxu0
        %v601 = vadd.f32 %v307, %v600
        %602 = vmatprep.mubr.bf16.mxu0 %v363
        %603 = vmatmul.mubr.bf16.gmra.mxu0 %v362
        %v604 = vpop.f32.mrf.mxu0
        %v605 = vadd.f32 %v303, %v604
        %v606 = vpop.f32.mrf.mxu0
        %v607 = vadd.f32 %v307, %v606
        %v608 = vpop.f32.mrf.mxu0
        %v609 = vadd.f32 %v303, %v608
        %v610 = vpop.f32.mrf.mxu0
        %v611 = vadd.f32 %v307, %v610
        %612 = vmatprep.mubr.bf16.mxu0 %v365
        %613 = vmatmul.mubr.bf16.gmra.mxu0 %v364
        %v614 = vpop.f32.mrf.mxu0
        %v615 = vadd.f32 %v303, %v614
        %v616 = vpop.f32.mrf.mxu0
        %v617 = vadd.f32 %v307, %v616
        %v618 = vpop.f32.mrf.mxu0
        %v619 = vadd.f32 %v303, %v618
        %v620 = vpop.f32.mrf.mxu0
        %v621 = vadd.f32 %v307, %v620
        %622 = vmatprep.mubr.bf16.mxu0 %v367
        %623 = vmatmul.mubr.bf16.gmra.mxu0 %v366
        %v624 = vpop.f32.mrf.mxu0
        %v625 = vadd.f32 %v303, %v624
        %v626 = vpop.f32.mrf.mxu0
        %v627 = vadd.f32 %v307, %v626
        %v628 = vpop.f32.mrf.mxu0
        %v629 = vadd.f32 %v303, %v628
        %v630 = vpop.f32.mrf.mxu0
        %v631 = vadd.f32 %v307, %v630
        %632 = vmatprep.mubr.bf16.mxu0 %v369
        %633 = vmatmul.mubr.bf16.gmra.mxu0 %v368
        %v634 = vpop.f32.mrf.mxu0
        %v635 = vadd.f32 %v303, %v634
        %v636 = vpop.f32.mrf.mxu0
        %v637 = vadd.f32 %v307, %v636
        %v638 = vpop.f32.mrf.mxu0
        %v639 = vadd.f32 %v303, %v638
        %v640 = vpop.f32.mrf.mxu0
        %v641 = vadd.f32 %v307, %v640
        %642 = vmatprep.mubr.bf16.mxu0 %v371
        %643 = vmatmul.mubr.bf16.gmra.mxu0 %v370
        %v644 = vpop.f32.mrf.mxu0
        %v645 = vadd.f32 %v303, %v644
        %v646 = vpop.f32.mrf.mxu0
        %v647 = vadd.f32 %v307, %v646
        %v648 = vpop.f32.mrf.mxu0
        %v649 = vadd.f32 %v303, %v648
        %v650 = vpop.f32.mrf.mxu0
        %v651 = vadd.f32 %v307, %v650
        %652 = vmatprep.mubr.bf16.mxu0 %v373
        %653 = vmatmul.mubr.bf16.gmra.mxu0 %v372
        %v654 = vpop.f32.mrf.mxu0
        %v655 = vadd.f32 %v303, %v654
        %v656 = vpop.f32.mrf.mxu0
        %v657 = vadd.f32 %v307, %v656
        %v658 = vpop.f32.mrf.mxu0
        %v659 = vadd.f32 %v303, %v658
        %v660 = vpop.f32.mrf.mxu0
        %v661 = vadd.f32 %v307, %v660
        %662 = vdwg.mxu0
        %v663 = vunpack.c.l.bf16 %v250
        %v664 = vunpack.c.h.bf16 %v250
        %v665 = vunpack.c.l.bf16 %v251
        %v666 = vunpack.c.h.bf16 %v251
        %v667 = vunpack.c.l.bf16 %v252
        %v668 = vunpack.c.h.bf16 %v252
        %v669 = vunpack.c.l.bf16 %v253
        %v670 = vunpack.c.h.bf16 %v253
        %v671 = vunpack.c.l.bf16 %v254
        %v672 = vunpack.c.h.bf16 %v254
        %v673 = vunpack.c.l.bf16 %v255
        %v674 = vunpack.c.h.bf16 %v255
        %v675 = vunpack.c.l.bf16 %v256
        %v676 = vunpack.c.h.bf16 %v256
        %v677 = vunpack.c.l.bf16 %v257
        %v678 = vunpack.c.h.bf16 %v257
        %v679 = vunpack.c.l.bf16 %v258
        %v680 = vunpack.c.h.bf16 %v258
        %v681 = vunpack.c.l.bf16 %v259
        %v682 = vunpack.c.h.bf16 %v259
        %v683 = vunpack.c.l.bf16 %v260
        %v684 = vunpack.c.h.bf16 %v260
        %v685 = vunpack.c.l.bf16 %v261
        %v686 = vunpack.c.h.bf16 %v261
        %v687 = vunpack.c.l.bf16 %v262
        %v688 = vunpack.c.h.bf16 %v262
        %v689 = vunpack.c.l.bf16 %v263
        %v690 = vunpack.c.h.bf16 %v263
        %v691 = vunpack.c.l.bf16 %v264
        %v692 = vunpack.c.h.bf16 %v264
        %v693 = vunpack.c.l.bf16 %v265
        %v694 = vunpack.c.h.bf16 %v265
        %v695 = vadd.f32 %v585, %v663
        %v696 = vadd.f32 %v587, %v664
        %v697 = vadd.f32 %v589, %v665
        %v698 = vadd.f32 %v591, %v666
        %v699 = vadd.f32 %v595, %v667
        %v700 = vadd.f32 %v597, %v668
        %v701 = vadd.f32 %v599, %v669
        %v702 = vadd.f32 %v601, %v670
        %v703 = vadd.f32 %v605, %v671
        %v704 = vadd.f32 %v607, %v672
        %v705 = vadd.f32 %v609, %v673
        %v706 = vadd.f32 %v611, %v674
        %v707 = vadd.f32 %v615, %v675
        %v708 = vadd.f32 %v617, %v676
        %v709 = vadd.f32 %v619, %v677
        %v710 = vadd.f32 %v621, %v678
        %v711 = vadd.f32 %v625, %v679
        %v712 = vadd.f32 %v627, %v680
        %v713 = vadd.f32 %v629, %v681
        %v714 = vadd.f32 %v631, %v682
        %v715 = vadd.f32 %v635, %v683
        %v716 = vadd.f32 %v637, %v684
        %v717 = vadd.f32 %v639, %v685
        %v718 = vadd.f32 %v641, %v686
        %v719 = vadd.f32 %v645, %v687
        %v720 = vadd.f32 %v647, %v688
        %v721 = vadd.f32 %v649, %v689
        %v722 = vadd.f32 %v651, %v690
        %v723 = vadd.f32 %v655, %v691
        %v724 = vadd.f32 %v657, %v692
        %v725 = vadd.f32 %v659, %v693
        %v726 = vadd.f32 %v661, %v694
        %727 = vst [vmem:[%s240] sm:$0xff] %v695
        %728 = vst [vmem:[%s240 + $0x8] sm:$0xff] %v696
        %729 = vst [vmem:[%s240 + $0x10] sm:$0xff] %v697
        %730 = vst [vmem:[%s240 + $0x18] sm:$0xff] %v698
        %731 = vst [vmem:[%s240 + $0x20] sm:$0xff] %v699
        %732 = vst [vmem:[%s240 + $0x28] sm:$0xff] %v700
        %733 = vst [vmem:[%s240 + $0x30] sm:$0xff] %v701
        %734 = vst [vmem:[%s240 + $0x38] sm:$0xff] %v702
        %735 = vst [vmem:[%s240 + $0x40] sm:$0xff] %v703
        %736 = vst [vmem:[%s240 + $0x48] sm:$0xff] %v704
        %737 = vst [vmem:[%s240 + $0x50] sm:$0xff] %v705
        %738 = vst [vmem:[%s240 + $0x58] sm:$0xff] %v706
        %739 = vst [vmem:[%s240 + $0x60] sm:$0xff] %v707
        %740 = vst [vmem:[%s240 + $0x68] sm:$0xff] %v708
        %741 = vst [vmem:[%s240 + $0x70] sm:$0xff] %v709
        %742 = vst [vmem:[%s240 + $0x78] sm:$0xff] %v710
        %743 = vst [vmem:[%s240 + $0x80] sm:$0xff] %v711
        %744 = vst [vmem:[%s240 + $0x88] sm:$0xff] %v712
        %745 = vst [vmem:[%s240 + $0x90] sm:$0xff] %v713
        %746 = vst [vmem:[%s240 + $0x98] sm:$0xff] %v714
        %747 = vst [vmem:[%s240 + $0xa0] sm:$0xff] %v715
        %748 = vst [vmem:[%s240 + $0xa8] sm:$0xff] %v716
        %749 = vst [vmem:[%s240 + $0xb0] sm:$0xff] %v717
        %750 = vst [vmem:[%s240 + $0xb8] sm:$0xff] %v718
        %751 = vst [vmem:[%s240 + $0xc0] sm:$0xff] %v719
        %752 = vst [vmem:[%s240 + $0xc8] sm:$0xff] %v720
        %753 = vst [vmem:[%s240 + $0xd0] sm:$0xff] %v721
        %754 = vst [vmem:[%s240 + $0xd8] sm:$0xff] %v722
        %755 = vst [vmem:[%s240 + $0xe0] sm:$0xff] %v723
        %756 = vst [vmem:[%s240 + $0xe8] sm:$0xff] %v724
        %757 = vst [vmem:[%s240 + $0xf0] sm:$0xff] %v725
        %758 = vst [vmem:[%s240 + $0xf8] sm:$0xff] %v726
        %s759 = sand.u32 %s121, 1
        %s760 = scalar_lea.sflag [#allocation4], %s759
        %s761 = sand.u32 %s121, 1
        %s762 = smul.addr %s761, 256
        %s763 = scalar_lea.vmem [#allocation7], %s762
        // Predicated region
        $region41: #{tpu_custom_call.1} parent=31 // pred_check
          %p764 = pneg %p131
        $region42: #{tpu_custom_call.1} parent=31 // pred_check_branch
          %766 = sbr.rel (%p764) target = $region44
        $region43: #{tpu_custom_call.1} parent=31 // pred_region
          %s767 = smul.u32 16, %s25
          %s768 = smul.u32 2, %s26
          %s770 = ssub.s32 4096, 4096
          %771 = vsyncadd %s760, %s770
          %s772 = smul.addr %s767, 2
          %s773 = sadd.s32 %s768, %s772
          %s774 = smul.addr %s773, 128
          %s775 = scalar_lea.hbm %s3, %s774
          %s776 = sshll.u32 %s763, 4
          %s777 = int_to_ptr.vmem [resolvable:$true] %s776
          %782 = dma.vmem_to_hbm [thread:$0]  %s777, 4096, %s775, %s760, 256, 256, 16
        $region44: #{tpu_custom_call.1} parent=31 // pred_fallthru
          _
      $region32: #{tpu_custom_call.1} parent=5 // pred_fallthru
        _
      %p783 = scmp.le.s32.totalorder 2, %s16
      // Predicated region
      $region45: #{tpu_custom_call.1} parent=5 // pred_check
        %p784 = pneg %p783
      $region46: #{tpu_custom_call.1} parent=5 // pred_check_branch
        %786 = sbr.rel (%p784) target = $region48
      $region47: #{tpu_custom_call.1} parent=5 // pred_region
        %s787 = ssub.s32 %s16, 2
        // Predicated region
        $region49: #{tpu_custom_call.1} parent=47 // pred_check
          %p788 = pneg %p137
        $region50: #{tpu_custom_call.1} parent=47 // pred_check_branch
          %790 = sbr.rel (%p788) target = $region52
        $region51: #{tpu_custom_call.1} parent=47 // pred_region
          %s791 = sand.u32 %s122, 1
          %s792 = scalar_lea.sflag [#allocation4], %s791
          %s793 = sand.u32 %s122, 1
          %s794 = smul.addr %s793, 256
          %s795 = scalar_lea.vmem [#allocation7], %s794
          %796 = dma.done %s792, 4096
        $region52: #{tpu_custom_call.1} parent=47 // pred_fallthru
          _
      $region48: #{tpu_custom_call.1} parent=5 // pred_fallthru
        _
    $region6: #{tpu_custom_call.1} parent=1 // loop_footer
      %s20 = sadd.s32 1, %s16
    $region7: #{tpu_custom_call.1} parent=1 // loop_footer_branch
      %15 = sbr.rel target = $region3
    $region8: #{tpu_custom_call.1} parent=1 // loop_exit
      _
    %797 = vsyncpa [#allocation3], 1
    %s798 = scalar_lea.sflag [#allocation3], 1
    %799 = vsyncpa %s798, 1
    %800 = vsyncpa [#allocation6], 1
    %801 = vsyncpa [#allocation4], 1
    %s802 = scalar_lea.sflag [#allocation4], 1
    %803 = vsyncpa %s802, 1

</llo_original>
